<compile_context>
chip_gen: v5e
topology: v5e:2x2
jax: 0.10.0
libtpu: 0.0.40
codegen_flags: <defaults>
</compile_context>

<pallas_src>
import jax
import jax.numpy as jnp
from jax import lax
from jax.experimental import pallas as pl
from jax.experimental.pallas import tpu as pltpu

# Model dims (small, module-consistent).
S = 8     # sequence length (token 0 is [CLS])
H = 32    # config.in_features (BERT hidden size)
L = 4     # config.num_bert_layers
A = 16    # config.attention_size
C = 4     # config.num_classes

# Kernel tiling.
BT = 8              # examples per grid step (sublane-aligned batch tile)
M_TILE = BT * S     # flat tokens per grid step
OUT_W = 128         # lane-dense packed output width: [pred | sem | zero pad]


def base_model_kernel(sent_w_ref,   # SMEM (1, L)        sentence_weight
                      hidden_ref,   # VMEM (L, BT*S, H)  stacked BERT hidden states (tile)
                      valid_ref,    # VMEM (BT, BT*S)    0/1 block-diagonal word-token validity
                      w_att_ref,    # VMEM (H, A)        MLP-attention projection
                      b_att_ref,    # VMEM (1, A)        MLP-attention bias
                      v_att_ref,    # VMEM (1, A)        MLP-attention score vector
                      w_pred_ref,   # VMEM (H, C)        pred_layer weight (transposed)
                      b_pred_ref,   # VMEM (1, C)        pred_layer bias
                      out_ref):     # VMEM (BT, OUT_W)   packed [pred | sem | 0] output
    # ---- sentence-weight layer mix: fused scalar*slab chain on lane-dense (BT*S, H)
    #      slabs (full vregs); scalars come from SMEM.
    rep = sent_w_ref[0, 0] * hidden_ref[0]
    for l in range(1, L):
        rep = rep + sent_w_ref[0, l] * hidden_ref[l]          # (M_TILE, H)

    # ---- additive (MLP) attention over ALL tokens of the tile.  [CLS], padded and
    #      cross-example tokens are removed via the validity mask, so no ragged
    #      [:, 1:] slice or reshape is needed.
    proj = jnp.tanh(
        jnp.dot(rep, w_att_ref[...], preferred_element_type=jnp.float32)
        + b_att_ref[...])                                     # (M_TILE, A)

    # Score reduction on the MXU: (BT, A) x (M_TILE, A)^T -> (BT, M_TILE); every row
    # holds the same per-token scores (v broadcast over the batch tile).
    v_b = jnp.broadcast_to(v_att_ref[...], (BT, A))
    scores = lax.dot_general(v_b, proj, (((1,), (1,)), ((), ())),
                             preferred_element_type=jnp.float32)   # (BT, M_TILE)

    valid_f = valid_ref[...]                                  # (BT, M_TILE) 0/1 floats
    valid = valid_f > 0.0
    scores = jnp.where(valid, scores, jnp.float32(-1e30))
    scores = scores - jnp.max(scores, axis=-1, keepdims=True)
    exp_s = jnp.exp(scores) * valid_f
    # Guard against a row with zero valid word tokens (reference would produce NaN).
    denom = jnp.maximum(jnp.sum(exp_s, axis=-1, keepdims=True), jnp.float32(1e-30))
    alpha = exp_s * pl.reciprocal(denom, approx=True)         # (BT, M_TILE), block-diagonal

    # Attention-weighted sum of values as a single MXU dot (block-diagonal alpha).
    sem = jnp.dot(alpha, rep, preferred_element_type=jnp.float32)       # (BT, H)

    # ---- prediction linear layer.
    pred = jnp.dot(sem, w_pred_ref[...],
                   preferred_element_type=jnp.float32) + b_pred_ref[...]  # (BT, C)

    # Single lane-dense (BT, 128) store: [pred | sem | zeros]; split in the wrapper.
    out_ref[...] = jnp.concatenate(
        [pred, sem, jnp.zeros((BT, OUT_W - C - H), jnp.float32)], axis=1)


def base_model_forward(sent_w, hidden, mask, w_att, b_att, v_att, w_pred, b_pred):
    """hidden: (L, B, S, H) stacked last-L BERT hidden states; mask: (B, S) 0/1 floats."""
    Ld, B, Sd, Hd = hidden.shape
    assert (Ld, Sd, Hd) == (L, S, H) and B % BT == 0
    # Wrapper-side layout plumbing (not compute): flatten (B, S) -> tokens axis.
    hidden_flat = hidden.reshape(L, B * S, H)

    # Block-diagonal word-token validity, one row per example, columns = flat tokens of
    # that example's batch tile:
    # valid[b, m] = 1 iff token m belongs to example b (m//S == b % BT), is not [CLS]
    #               (m % S >= 1) and is unmasked.
    m_idx = jnp.arange(BT * S)
    member = (m_idx[None, :] // S) == (jnp.arange(B)[:, None] % BT)
    not_cls = (m_idx[None, :] % S) >= 1
    mask_rep = jnp.tile(mask, (1, BT)) > 0                    # [b, m] = mask[b, m % S]
    valid = (member & not_cls & mask_rep).astype(jnp.float32)  # (B, BT*S)

    out = pl.pallas_call(
        base_model_kernel,
        out_shape=jax.ShapeDtypeStruct((B, OUT_W), jnp.float32),
        grid=(B // BT,),
        in_specs=[
            pl.BlockSpec(memory_space=pltpu.MemorySpace.SMEM),     # sentence_weight
            pl.BlockSpec((L, BT * S, H), lambda i: (0, i, 0)),     # hidden states (tiled)
            pl.BlockSpec((BT, BT * S), lambda i: (i, 0)),          # validity (tiled)
            pl.BlockSpec((H, A), lambda i: (0, 0)),                # W_att
            pl.BlockSpec((1, A), lambda i: (0, 0)),                # b_att
            pl.BlockSpec((1, A), lambda i: (0, 0)),                # v_att
            pl.BlockSpec((H, C), lambda i: (0, 0)),                # W_pred
            pl.BlockSpec((1, C), lambda i: (0, 0)),                # b_pred
        ],
        out_specs=pl.BlockSpec((BT, OUT_W), lambda i: (i, 0)),
        compiler_params=pltpu.CompilerParams(
            dimension_semantics=("parallel",)),   # shard batch tiles across v7x TCs
    )(sent_w, hidden_flat, valid, w_att, b_att, v_att, w_pred, b_pred)

    pred = out[:, :C]
    sem = out[:, C:C + H]
    return pred, sem


def reference_forward(sent_w, hidden, mask, w_att, b_att, v_att, w_pred, b_pred):
    """Plain-JAX mirror of the torch forward (inference path) for verification."""
    rep = jnp.einsum('l,lbsh->bsh', sent_w[0], hidden)         # sentence-weight layer mix
    word = rep[:, 1:, :]
    m = mask[:, 1:]
    proj = jnp.tanh(jnp.einsum('bsh,ha->bsa', word, w_att) + b_att[0])
    scores = jnp.einsum('bsa,a->bs', proj, v_att[0])
    scores = jnp.where(m > 0, scores, -1e30)
    scores = scores - jnp.max(scores, axis=-1, keepdims=True)
    e = jnp.exp(scores) * (m > 0)
    alpha = e / jnp.sum(e, axis=-1, keepdims=True)
    sem = jnp.einsum('bs,bsh->bh', alpha, word)
    pred = sem @ w_pred + b_pred[0]
    return pred, sem


if __name__ == "__main__":
    key = jax.random.PRNGKey(0)
    k = jax.random.split(key, 8)

    B = 16   # batch: two grid tiles of BT=8 examples (parallel axis)
    # Synthetic BERT outputs (frozen backbone not reimplemented).
    hidden = jax.random.normal(k[0], (L, B, S, H), dtype=jnp.float32)
    # Attention mask: variable prefix lengths (each >= 2 so every example has word tokens).
    lens = jnp.array([8, 5, 8, 3, 6, 8, 2, 7, 8, 4, 5, 8, 3, 6, 8, 2])
    mask = (jnp.arange(S)[None, :] < lens[:, None]).astype(jnp.float32)

    # Deterministic parameter init (mirrors module __init__ shapes).
    sent_w = jax.random.normal(k[1], (1, L), dtype=jnp.float32)          # sentence_weight
    w_att = 0.1 * jax.random.normal(k[2], (H, A), dtype=jnp.float32)     # MLPAttention proj
    b_att = 0.1 * jax.random.normal(k[3], (1, A), dtype=jnp.float32)
    v_att = 0.1 * jax.random.normal(k[4], (1, A), dtype=jnp.float32)     # MLPAttention score vec
    w_pred = 0.1 * jax.random.normal(k[5], (H, C), dtype=jnp.float32)    # pred_layer.weight^T
    b_pred = 0.1 * jax.random.normal(k[6], (1, C), dtype=jnp.float32)    # pred_layer.bias

    pred, sem = base_model_forward(sent_w, hidden, mask,
                                   w_att, b_att, v_att, w_pred, b_pred)
    jax.block_until_ready((pred, sem))

    pred_r, sem_r = reference_forward(sent_w, hidden, mask,
                                      w_att, b_att, v_att, w_pred, b_pred)
    assert jnp.allclose(pred, pred_r, atol=3e-3, rtol=3e-3), "predict mismatch"
    assert jnp.allclose(sem, sem_r, atol=3e-3, rtol=3e-3), "sentence_semantic mismatch"

    print("KERNEL_OK")
</pallas_src>

<mosaic_0001>
module attributes {stable_mosaic.version = 11 : i64} {
  func.func @base_model_kernel(%arg0: i32, %arg1: memref<1x4xf32, #tpu.memory_space<smem>>, %arg2: memref<4x64x32xf32, #tpu.memory_space<vmem>>, %arg3: memref<8x64xf32, #tpu.memory_space<vmem>>, %arg4: memref<32x16xf32, #tpu.memory_space<vmem>>, %arg5: memref<1x16xf32, #tpu.memory_space<vmem>>, %arg6: memref<1x16xf32, #tpu.memory_space<vmem>>, %arg7: memref<32x4xf32, #tpu.memory_space<vmem>>, %arg8: memref<1x4xf32, #tpu.memory_space<vmem>>, %arg9: memref<8x128xf32, #tpu.memory_space<vmem>>) attributes {dimension_semantics = [#tpu.dimension_semantics<parallel>], iteration_bounds = array<i64: 2>, scalar_prefetch = 0 : i64, scratch_operands = 0 : i64, tpu.core_type = #tpu.core_type<tc>, window_params = [{transform_indices = @transform_0, window_bounds = array<i64: 1, 4>}, {transform_indices = @transform_1, window_bounds = array<i64: 4, 64, 32>}, {transform_indices = @transform_2, window_bounds = array<i64: 8, 64>}, {pipeline_mode = #tpu.pipeline_mode<synchronous>, transform_indices = @transform_3, window_bounds = array<i64: 32, 16>}, {pipeline_mode = #tpu.pipeline_mode<synchronous>, transform_indices = @transform_4, window_bounds = array<i64: 1, 16>}, {pipeline_mode = #tpu.pipeline_mode<synchronous>, transform_indices = @transform_5, window_bounds = array<i64: 1, 16>}, {pipeline_mode = #tpu.pipeline_mode<synchronous>, transform_indices = @transform_6, window_bounds = array<i64: 32, 4>}, {pipeline_mode = #tpu.pipeline_mode<synchronous>, transform_indices = @transform_7, window_bounds = array<i64: 1, 4>}, {transform_indices = @transform_8, window_bounds = array<i64: 8, 128>}]} {
    %c0 = arith.constant 0 : index
    %c0_0 = arith.constant 0 : index
    %0 = memref.load %arg1[%c0, %c0_0] : memref<1x4xf32, #tpu.memory_space<smem>>
    %c0_1 = arith.constant 0 : index
    %c0_2 = arith.constant 0 : index
    %c0_3 = arith.constant 0 : index
    %1 = vector.load %arg2[%c0_1, %c0_2, %c0_3] : memref<4x64x32xf32, #tpu.memory_space<vmem>>, vector<1x64x32xf32>
    %2 = vector.shape_cast %1 : vector<1x64x32xf32> to vector<64x32xf32>
    %3 = vector.broadcast %0 : f32 to vector<64x32xf32>
    %4 = arith.mulf %3, %2 : vector<64x32xf32>
    %c0_4 = arith.constant 0 : index
    %c1 = arith.constant 1 : index
    %5 = memref.load %arg1[%c0_4, %c1] : memref<1x4xf32, #tpu.memory_space<smem>>
    %c1_5 = arith.constant 1 : index
    %c0_6 = arith.constant 0 : index
    %c0_7 = arith.constant 0 : index
    %6 = vector.load %arg2[%c1_5, %c0_6, %c0_7] : memref<4x64x32xf32, #tpu.memory_space<vmem>>, vector<1x64x32xf32>
    %7 = vector.shape_cast %6 : vector<1x64x32xf32> to vector<64x32xf32>
    %8 = vector.broadcast %5 : f32 to vector<64x32xf32>
    %9 = arith.mulf %8, %7 : vector<64x32xf32>
    %10 = arith.addf %4, %9 : vector<64x32xf32>
    %c0_8 = arith.constant 0 : index
    %c2 = arith.constant 2 : index
    %11 = memref.load %arg1[%c0_8, %c2] : memref<1x4xf32, #tpu.memory_space<smem>>
    %c2_9 = arith.constant 2 : index
    %c0_10 = arith.constant 0 : index
    %c0_11 = arith.constant 0 : index
    %12 = vector.load %arg2[%c2_9, %c0_10, %c0_11] : memref<4x64x32xf32, #tpu.memory_space<vmem>>, vector<1x64x32xf32>
    %13 = vector.shape_cast %12 : vector<1x64x32xf32> to vector<64x32xf32>
    %14 = vector.broadcast %11 : f32 to vector<64x32xf32>
    %15 = arith.mulf %14, %13 : vector<64x32xf32>
    %16 = arith.addf %10, %15 : vector<64x32xf32>
    %c0_12 = arith.constant 0 : index
    %c3 = arith.constant 3 : index
    %17 = memref.load %arg1[%c0_12, %c3] : memref<1x4xf32, #tpu.memory_space<smem>>
    %c3_13 = arith.constant 3 : index
    %c0_14 = arith.constant 0 : index
    %c0_15 = arith.constant 0 : index
    %18 = vector.load %arg2[%c3_13, %c0_14, %c0_15] : memref<4x64x32xf32, #tpu.memory_space<vmem>>, vector<1x64x32xf32>
    %19 = vector.shape_cast %18 : vector<1x64x32xf32> to vector<64x32xf32>
    %20 = vector.broadcast %17 : f32 to vector<64x32xf32>
    %21 = arith.mulf %20, %19 : vector<64x32xf32>
    %22 = arith.addf %16, %21 : vector<64x32xf32>
    %c0_16 = arith.constant 0 : index
    %c0_17 = arith.constant 0 : index
    %23 = vector.load %arg4[%c0_16, %c0_17] : memref<32x16xf32, #tpu.memory_space<vmem>>, vector<32x16xf32>
    %cst = arith.constant dense<0.000000e+00> : vector<64x16xf32>
    %24 = tpu.matmul %22, %23, %cst {dimension_numbers = #tpu.dot_dimension_numbers<[1], [0], [0], [1], [0, 0, 1, 1], [], []>} : vector<64x32xf32>, vector<32x16xf32>, vector<64x16xf32> -> vector<64x16xf32>
    %c0_18 = arith.constant 0 : index
    %c0_19 = arith.constant 0 : index
    %25 = vector.load %arg5[%c0_18, %c0_19] : memref<1x16xf32, #tpu.memory_space<vmem>>, vector<1x16xf32>
    %26 = vector.broadcast %25 : vector<1x16xf32> to vector<64x16xf32>
    %27 = arith.addf %24, %26 : vector<64x16xf32>
    %28 = math.tanh %27 : vector<64x16xf32>
    %c0_20 = arith.constant 0 : index
    %c0_21 = arith.constant 0 : index
    %29 = vector.load %arg6[%c0_20, %c0_21] : memref<1x16xf32, #tpu.memory_space<vmem>>, vector<1x16xf32>
    %30 = vector.shape_cast %29 : vector<1x16xf32> to vector<1x16xf32>
    %31 = vector.broadcast %30 : vector<1x16xf32> to vector<8x16xf32>
    %cst_22 = arith.constant dense<0.000000e+00> : vector<8x64xf32>
    %32 = tpu.matmul %31, %28, %cst_22 {dimension_numbers = #tpu.dot_dimension_numbers<[1], [1], [0], [0], [0, 0, 1, 0], [], []>} : vector<8x16xf32>, vector<64x16xf32>, vector<8x64xf32> -> vector<8x64xf32>
    %c0_23 = arith.constant 0 : index
    %c0_24 = arith.constant 0 : index
    %33 = vector.load %arg3[%c0_23, %c0_24] : memref<8x64xf32, #tpu.memory_space<vmem>>, vector<8x64xf32>
    %cst_25 = arith.constant 0.000000e+00 : f32
    %34 = vector.broadcast %cst_25 : f32 to vector<8x64xf32>
    %35 = arith.cmpf ogt, %33, %34 : vector<8x64xf32>
    %cst_26 = arith.constant -1.000000e+30 : f32
    %36 = vector.broadcast %cst_26 : f32 to vector<8x64xf32>
    %37 = arith.select %35, %32, %36 : vector<8x64xi1>, vector<8x64xf32>
    %cst_27 = arith.constant dense<0xFF800000> : vector<8xf32>
    %38 = vector.multi_reduction <maximumf>, %37, %cst_27 [1] : vector<8x64xf32> to vector<8xf32>
    %39 = vector.shape_cast %38 : vector<8xf32> to vector<8x1xf32>
    %40 = vector.broadcast %39 : vector<8x1xf32> to vector<8x64xf32>
    %41 = arith.subf %37, %40 : vector<8x64xf32>
    %42 = math.exp %41 : vector<8x64xf32>
    %43 = arith.mulf %42, %33 : vector<8x64xf32>
    %cst_28 = arith.constant dense<0.000000e+00> : vector<8xf32>
    %44 = vector.multi_reduction <add>, %43, %cst_28 [1] : vector<8x64xf32> to vector<8xf32>
    %45 = vector.shape_cast %44 : vector<8xf32> to vector<8x1xf32>
    %cst_29 = arith.constant 1.000000e-30 : f32
    %46 = vector.broadcast %cst_29 : f32 to vector<8x1xf32>
    %47 = arith.maximumf %45, %46 : vector<8x1xf32>
    %48 = tpu.reciprocal %47 {approx = true} : vector<8x1xf32> -> vector<8x1xf32>
    %49 = vector.broadcast %48 : vector<8x1xf32> to vector<8x64xf32>
    %50 = arith.mulf %43, %49 : vector<8x64xf32>
    %cst_30 = arith.constant dense<0.000000e+00> : vector<8x32xf32>
    %51 = tpu.matmul %50, %22, %cst_30 {dimension_numbers = #tpu.dot_dimension_numbers<[1], [0], [0], [1], [0, 0, 1, 1], [], []>} : vector<8x64xf32>, vector<64x32xf32>, vector<8x32xf32> -> vector<8x32xf32>
    %c0_31 = arith.constant 0 : index
    %c0_32 = arith.constant 0 : index
    %52 = vector.load %arg7[%c0_31, %c0_32] : memref<32x4xf32, #tpu.memory_space<vmem>>, vector<32x4xf32>
    %cst_33 = arith.constant dense<0.000000e+00> : vector<8x4xf32>
    %53 = tpu.matmul %51, %52, %cst_33 {dimension_numbers = #tpu.dot_dimension_numbers<[1], [0], [0], [1], [0, 0, 1, 1], [], []>} : vector<8x32xf32>, vector<32x4xf32>, vector<8x4xf32> -> vector<8x4xf32>
    %c0_34 = arith.constant 0 : index
    %c0_35 = arith.constant 0 : index
    %54 = vector.load %arg8[%c0_34, %c0_35] : memref<1x4xf32, #tpu.memory_space<vmem>>, vector<1x4xf32>
    %55 = vector.broadcast %54 : vector<1x4xf32> to vector<8x4xf32>
    %56 = arith.addf %53, %55 : vector<8x4xf32>
    %cst_36 = arith.constant 0.000000e+00 : f32
    %57 = vector.broadcast %cst_36 : f32 to vector<8x92xf32>
    %58 = tpu.concatenate %56, %51, %57 in 1 : vector<8x4xf32>, vector<8x32xf32>, vector<8x92xf32> -> vector<8x128xf32>
    %c0_37 = arith.constant 0 : index
    %c0_38 = arith.constant 0 : index
    %59 = vector.load %arg9[%c0_37, %c0_38] : memref<8x128xf32, #tpu.memory_space<vmem>>, vector<8x128xf32>
    tpu.vector_store %arg9[%c0_37, %c0_38], %58 {strides = array<i32>} : memref<8x128xf32, #tpu.memory_space<vmem>>, vector<8x128xf32>,
    return
  }
  func.func @transform_0(%arg0: i32) -> (i32, i32) {
    %c0_i32 = arith.constant 0 : i32
    %c0_i32_0 = arith.constant 0 : i32
    %c0_i32_1 = arith.constant 0 : i32
    return %c0_i32, %c0_i32_0 : i32, i32
  }
  func.func @transform_1(%arg0: i32) -> (i32, i32, i32) {
    %c0_i32 = arith.constant 0 : i32
    %c0_i32_0 = arith.constant 0 : i32
    %c0_i32_1 = arith.constant 0 : i32
    return %c0_i32, %arg0, %c0_i32_0 : i32, i32, i32
  }
  func.func @transform_2(%arg0: i32) -> (i32, i32) {
    %c0_i32 = arith.constant 0 : i32
    %c0_i32_0 = arith.constant 0 : i32
    return %arg0, %c0_i32 : i32, i32
  }
  func.func @transform_3(%arg0: i32) -> (i32, i32) {
    %c0_i32 = arith.constant 0 : i32
    %c0_i32_0 = arith.constant 0 : i32
    %c0_i32_1 = arith.constant 0 : i32
    return %c0_i32, %c0_i32_0 : i32, i32
  }
  func.func @transform_4(%arg0: i32) -> (i32, i32) {
    %c0_i32 = arith.constant 0 : i32
    %c0_i32_0 = arith.constant 0 : i32
    %c0_i32_1 = arith.constant 0 : i32
    return %c0_i32, %c0_i32_0 : i32, i32
  }
  func.func @transform_5(%arg0: i32) -> (i32, i32) {
    %c0_i32 = arith.constant 0 : i32
    %c0_i32_0 = arith.constant 0 : i32
    %c0_i32_1 = arith.constant 0 : i32
    return %c0_i32, %c0_i32_0 : i32, i32
  }
  func.func @transform_6(%arg0: i32) -> (i32, i32) {
    %c0_i32 = arith.constant 0 : i32
    %c0_i32_0 = arith.constant 0 : i32
    %c0_i32_1 = arith.constant 0 : i32
    return %c0_i32, %c0_i32_0 : i32, i32
  }
  func.func @transform_7(%arg0: i32) -> (i32, i32) {
    %c0_i32 = arith.constant 0 : i32
    %c0_i32_0 = arith.constant 0 : i32
    %c0_i32_1 = arith.constant 0 : i32
    return %c0_i32, %c0_i32_0 : i32, i32
  }
  func.func @transform_8(%arg0: i32) -> (i32, i32) {
    %c0_i32 = arith.constant 0 : i32
    %c0_i32_0 = arith.constant 0 : i32
    return %arg0, %c0_i32 : i32, i32
  }
}

</mosaic_0001>

<llo_original>
// kernel: tpu_custom_call.1
$region0: #{tpu_custom_call.1}
  #allocation0 [shape = 'u32[]', space=smem, size = 0x4, offset = 0x4, fixed_abs, tag = 'smem constant byte address 0x4 - core index']
  #allocation1 [shape = 'u32[72,128]{1,0:T(1,128)}', space=vmem, size = 0x9000, scoped, tag = 'internal scratch']
  %s0 = inlined_call_operand.vmem [shape: f32[1,4], index: 0, kind: input, shape index: {}]
  %s1 = inlined_call_operand.vmem [shape: f32[4,128,32], index: 1, kind: input, shape index: {}]
  %s2 = inlined_call_operand.vmem [shape: f32[16,64], index: 2, kind: input, shape index: {}]
  %s3 = inlined_call_operand.vmem [shape: f32[32,16], index: 3, kind: input, shape index: {}]
  %s4 = inlined_call_operand.vmem [shape: f32[1,16], index: 4, kind: input, shape index: {}]
  %s5 = inlined_call_operand.vmem [shape: f32[1,16], index: 5, kind: input, shape index: {}]
  %s6 = inlined_call_operand.vmem [shape: f32[32,4], index: 6, kind: input, shape index: {}]
  %s7 = inlined_call_operand.vmem [shape: f32[1,4], index: 7, kind: input, shape index: {}]
  %s8 = inlined_call_operand.hbm [shape: f32[16,128], index: 8, kind: output, shape index: {}]
  %s9 = sld [smem:[#allocation0]]
  $region107: #{tpu_custom_call.1} parent=0
    _
  %s11 = ssub.s32 1, %s9
  %s12 = scalar_select 0, %s11, %s9
  $region1: #{tpu_custom_call.1} parent=0
    #allocation2 [shape = 'u8[512]{0}', space=smem, size = 0x200, scoped, tag = 'input window, operand 0, single buffered']
    #allocation3 [shape = 's32[2]{0}', space=sflag, size = 0x8, scoped, tag = 'scoped memory for tpu_custom_call.1']
    #allocation4 [shape = 's32[2]{0}', space=sflag, size = 0x8, scoped, tag = 'scoped memory for tpu_custom_call.1']
    #allocation5 [shape = 'u8[262144]{0}', space=vmem, size = 0x40000, scoped, tag = 'input window, operand 1']
    #allocation6 [shape = 'u8[8192]{0}', space=vmem, size = 0x2000, scoped, tag = 'output window, operand 0']
    %13 = vsyncpa [#allocation4], 0
    %14 = vsyncpa [#allocation3], 0
    %s15 = scalar_lea.sflag [#allocation3], 1
    %16 = vsyncpa %s15, 0
    loop: start=0, step=1, limit=4
    $region2: #{tpu_custom_call.1} parent=1 // loop_pre_header
      _
    $region3: #{tpu_custom_call.1} parent=1 // loop_header
      %s18 = sphi 0, %s22
      %p19 = scmp.ge.s32.totalorder %s18, 4
      %s26 = sphi 0, %s26
      %s28 = sphi 0, %s26
      %s29 = sphi 0, %s28
      %s43 = sphi 0, %s29
      %s49 = sphi 0, %s51
      %s52 = sphi 0, %s49
      %s53 = sphi 0, %s52
      %s69 = sphi 0, %s53
      %s75 = sphi 0, %s77
      %s78 = sphi 0, %s75
      %s79 = sphi 0, %s78
      %s95 = sphi 0, %s79
      %s99 = sphi 0, %s99
      %s101 = sphi 0, %s99
      %s102 = sphi 0, %s101
      %s116 = sphi 0, %s102
      %s120 = sphi 0, %s120
      %s122 = sphi 0, %s120
      %s123 = sphi 0, %s122
      %s137 = sphi 0, %s123
      %s141 = sphi 0, %s141
      %s143 = sphi 0, %s141
      %s144 = sphi 0, %s143
      %s158 = sphi 0, %s144
      %s162 = sphi 0, %s162
      %s164 = sphi 0, %s162
      %s165 = sphi 0, %s164
      %s179 = sphi 0, %s165
      %s183 = sphi 0, %s183
      %s185 = sphi 0, %s183
      %s186 = sphi 0, %s185
      %s200 = sphi 0, %s186
      %s206 = sphi 0, %s208
      %s209 = sphi 0, %s206
      %s210 = sphi 0, %s209
      %s226 = sphi 0, %s210
    $region4: #{tpu_custom_call.1} parent=1 // loop_header_branch
      %21 = sbr.rel (%p19) target = $region8
    $region5: #{tpu_custom_call.1} parent=1 // loop_body
      %s23 = ssub.s32 %s18, 1
      %s24 = ssub.s32 %s18, 2
      %s25 = sadd.s32 %s18, 1
      %s27 = sadd.s32 %s26, 1
      %p30 = scmp.eq.s32.totalorder %s18, 1
      %p31 = scmp.ne.s32.totalorder %s26, %s28
      %p32 = scmp.eq.s32.totalorder %s18, 0
      %p33 = por %p31, %p32
      %p34 = scmp.ne.s32.totalorder %s26, %s28
      %p35 = scmp.eq.s32.totalorder %s23, 1
      %p36 = por %p34, %p35
      %p37 = scmp.ne.s32.totalorder %s28, %s29
      %p38 = scmp.eq.s32.totalorder %s23, 0
      %p39 = por %p37, %p38
      %p40 = scmp.ne.s32.totalorder %s28, %s29
      %p41 = scmp.eq.s32.totalorder %s24, 1
      %p42 = por %p40, %p41
      %p44 = scmp.ne.s32.totalorder %s29, %s43
      %p45 = scmp.eq.s32.totalorder %s24, 0
      %p46 = por %p44, %p45
      %s47 = ssub.s32 %s18, %s25
      %p48 = scmp.eq.s32.totalorder %s47, 0
      %s50 = sadd.s32 %s49, 1
      %s51 = scalar_select %p48, %s49, %s50
      %p54 = pneg %p48
      %p55 = scmp.eq.s32.totalorder %s18, 1
      %p56 = por %p54, %p55
      %p57 = scmp.ne.s32.totalorder %s49, %s52
      %p58 = scmp.eq.s32.totalorder %s18, 0
      %p59 = por %p57, %p58
      %p60 = scmp.ne.s32.totalorder %s49, %s52
      %p61 = scmp.eq.s32.totalorder %s23, 1
      %p62 = por %p60, %p61
      %p63 = scmp.ne.s32.totalorder %s52, %s53
      %p64 = scmp.eq.s32.totalorder %s23, 0
      %p65 = por %p63, %p64
      %p66 = scmp.ne.s32.totalorder %s52, %s53
      %p67 = scmp.eq.s32.totalorder %s24, 1
      %p68 = por %p66, %p67
      %p70 = scmp.ne.s32.totalorder %s53, %s69
      %p71 = scmp.eq.s32.totalorder %s24, 0
      %p72 = por %p70, %p71
      %s73 = ssub.s32 %s18, %s25
      %p74 = scmp.eq.s32.totalorder %s73, 0
      %s76 = sadd.s32 %s75, 1
      %s77 = scalar_select %p74, %s75, %s76
      %p80 = pneg %p74
      %p81 = scmp.eq.s32.totalorder %s18, 1
      %p82 = por %p80, %p81
      %p83 = scmp.ne.s32.totalorder %s75, %s78
      %p84 = scmp.eq.s32.totalorder %s18, 0
      %p85 = por %p83, %p84
      %p86 = scmp.ne.s32.totalorder %s75, %s78
      %p87 = scmp.eq.s32.totalorder %s23, 1
      %p88 = por %p86, %p87
      %p89 = scmp.ne.s32.totalorder %s78, %s79
      %p90 = scmp.eq.s32.totalorder %s23, 0
      %p91 = por %p89, %p90
      %p92 = scmp.ne.s32.totalorder %s78, %s79
      %p93 = scmp.eq.s32.totalorder %s24, 1
      %p94 = por %p92, %p93
      %p96 = scmp.ne.s32.totalorder %s79, %s95
      %p97 = scmp.eq.s32.totalorder %s24, 0
      %p98 = por %p96, %p97
      %s100 = sadd.s32 %s99, 1
      %p103 = scmp.eq.s32.totalorder %s18, 1
      %p104 = scmp.ne.s32.totalorder %s99, %s101
      %p105 = scmp.eq.s32.totalorder %s18, 0
      %p106 = por %p104, %p105
      %p107 = scmp.ne.s32.totalorder %s99, %s101
      %p108 = scmp.eq.s32.totalorder %s23, 1
      %p109 = por %p107, %p108
      %p110 = scmp.ne.s32.totalorder %s101, %s102
      %p111 = scmp.eq.s32.totalorder %s23, 0
      %p112 = por %p110, %p111
      %p113 = scmp.ne.s32.totalorder %s101, %s102
      %p114 = scmp.eq.s32.totalorder %s24, 1
      %p115 = por %p113, %p114
      %p117 = scmp.ne.s32.totalorder %s102, %s116
      %p118 = scmp.eq.s32.totalorder %s24, 0
      %p119 = por %p117, %p118
      %s121 = sadd.s32 %s120, 1
      %p124 = scmp.eq.s32.totalorder %s18, 1
      %p125 = scmp.ne.s32.totalorder %s120, %s122
      %p126 = scmp.eq.s32.totalorder %s18, 0
      %p127 = por %p125, %p126
      %p128 = scmp.ne.s32.totalorder %s120, %s122
      %p129 = scmp.eq.s32.totalorder %s23, 1
      %p130 = por %p128, %p129
      %p131 = scmp.ne.s32.totalorder %s122, %s123
      %p132 = scmp.eq.s32.totalorder %s23, 0
      %p133 = por %p131, %p132
      %p134 = scmp.ne.s32.totalorder %s122, %s123
      %p135 = scmp.eq.s32.totalorder %s24, 1
      %p136 = por %p134, %p135
      %p138 = scmp.ne.s32.totalorder %s123, %s137
      %p139 = scmp.eq.s32.totalorder %s24, 0
      %p140 = por %p138, %p139
      %s142 = sadd.s32 %s141, 1
      %p145 = scmp.eq.s32.totalorder %s18, 1
      %p146 = scmp.ne.s32.totalorder %s141, %s143
      %p147 = scmp.eq.s32.totalorder %s18, 0
      %p148 = por %p146, %p147
      %p149 = scmp.ne.s32.totalorder %s141, %s143
      %p150 = scmp.eq.s32.totalorder %s23, 1
      %p151 = por %p149, %p150
      %p152 = scmp.ne.s32.totalorder %s143, %s144
      %p153 = scmp.eq.s32.totalorder %s23, 0
      %p154 = por %p152, %p153
      %p155 = scmp.ne.s32.totalorder %s143, %s144
      %p156 = scmp.eq.s32.totalorder %s24, 1
      %p157 = por %p155, %p156
      %p159 = scmp.ne.s32.totalorder %s144, %s158
      %p160 = scmp.eq.s32.totalorder %s24, 0
      %p161 = por %p159, %p160
      %s163 = sadd.s32 %s162, 1
      %p166 = scmp.eq.s32.totalorder %s18, 1
      %p167 = scmp.ne.s32.totalorder %s162, %s164
      %p168 = scmp.eq.s32.totalorder %s18, 0
      %p169 = por %p167, %p168
      %p170 = scmp.ne.s32.totalorder %s162, %s164
      %p171 = scmp.eq.s32.totalorder %s23, 1
      %p172 = por %p170, %p171
      %p173 = scmp.ne.s32.totalorder %s164, %s165
      %p174 = scmp.eq.s32.totalorder %s23, 0
      %p175 = por %p173, %p174
      %p176 = scmp.ne.s32.totalorder %s164, %s165
      %p177 = scmp.eq.s32.totalorder %s24, 1
      %p178 = por %p176, %p177
      %p180 = scmp.ne.s32.totalorder %s165, %s179
      %p181 = scmp.eq.s32.totalorder %s24, 0
      %p182 = por %p180, %p181
      %s184 = sadd.s32 %s183, 1
      %p187 = scmp.eq.s32.totalorder %s18, 1
      %p188 = scmp.ne.s32.totalorder %s183, %s185
      %p189 = scmp.eq.s32.totalorder %s18, 0
      %p190 = por %p188, %p189
      %p191 = scmp.ne.s32.totalorder %s183, %s185
      %p192 = scmp.eq.s32.totalorder %s23, 1
      %p193 = por %p191, %p192
      %p194 = scmp.ne.s32.totalorder %s185, %s186
      %p195 = scmp.eq.s32.totalorder %s23, 0
      %p196 = por %p194, %p195
      %p197 = scmp.ne.s32.totalorder %s185, %s186
      %p198 = scmp.eq.s32.totalorder %s24, 1
      %p199 = por %p197, %p198
      %p201 = scmp.ne.s32.totalorder %s186, %s200
      %p202 = scmp.eq.s32.totalorder %s24, 0
      %p203 = por %p201, %p202
      %s204 = ssub.s32 %s18, %s25
      %p205 = scmp.eq.s32.totalorder %s204, 0
      %s207 = sadd.s32 %s206, 1
      %s208 = scalar_select %p205, %s206, %s207
      %p211 = pneg %p205
      %p212 = scmp.eq.s32.totalorder %s18, 1
      %p213 = por %p211, %p212
      %p214 = scmp.ne.s32.totalorder %s206, %s209
      %p215 = scmp.eq.s32.totalorder %s18, 0
      %p216 = por %p214, %p215
      %p217 = scmp.ne.s32.totalorder %s206, %s209
      %p218 = scmp.eq.s32.totalorder %s23, 1
      %p219 = por %p217, %p218
      %p220 = scmp.ne.s32.totalorder %s209, %s210
      %p221 = scmp.eq.s32.totalorder %s23, 0
      %p222 = por %p220, %p221
      %p223 = scmp.ne.s32.totalorder %s209, %s210
      %p224 = scmp.eq.s32.totalorder %s24, 1
      %p225 = por %p223, %p224
      %p227 = scmp.ne.s32.totalorder %s210, %s226
      %p228 = scmp.eq.s32.totalorder %s24, 0
      %p229 = por %p227, %p228
      %p230 = scmp.le.s32.totalorder 1, %s18
      %p231 = scmp.lt.s32.totalorder %s18, 3
      %p232 = pnand %p230, %p231
      %p233 = pneg %p232
      // Predicated region
      $region9: #{tpu_custom_call.1} parent=5 // pred_check
        _
      $region10: #{tpu_custom_call.1} parent=5 // pred_check_branch
        %235 = sbr.rel (%p232) target = $region12
      $region11: #{tpu_custom_call.1} parent=5 // pred_region
        %s236 = ssub.s32 %s18, 1
        // Predicated region
        $region13: #{tpu_custom_call.1} parent=11 // pred_check
          %p237 = pneg %p39
        $region14: #{tpu_custom_call.1} parent=11 // pred_check_branch
          %239 = sbr.rel (%p237) target = $region16
        $region15: #{tpu_custom_call.1} parent=11 // pred_region
          %241 = vsyncadd [#allocation4], 0
          %s243 = sshll.u32 %s0, 4
          %s244 = int_to_ptr.vmem [resolvable:$true] %s243
          %246 = dma.vmem_to_smem %s244, 16, [#allocation2], [#allocation4]
        $region16: #{tpu_custom_call.1} parent=11 // pred_fallthru
          _
        // Predicated region
        $region17: #{tpu_custom_call.1} parent=11 // pred_check
          %p247 = pneg %p112
        $region18: #{tpu_custom_call.1} parent=11 // pred_check_branch
          %249 = sbr.rel (%p247) target = $region20
        $region19: #{tpu_custom_call.1} parent=11 // pred_region
          _
        $region20: #{tpu_custom_call.1} parent=11 // pred_fallthru
          _
        // Predicated region
        $region21: #{tpu_custom_call.1} parent=11 // pred_check
          %p250 = pneg %p133
        $region22: #{tpu_custom_call.1} parent=11 // pred_check_branch
          %252 = sbr.rel (%p250) target = $region24
        $region23: #{tpu_custom_call.1} parent=11 // pred_region
          _
        $region24: #{tpu_custom_call.1} parent=11 // pred_fallthru
          _
        // Predicated region
        $region25: #{tpu_custom_call.1} parent=11 // pred_check
          %p253 = pneg %p154
        $region26: #{tpu_custom_call.1} parent=11 // pred_check_branch
          %255 = sbr.rel (%p253) target = $region28
        $region27: #{tpu_custom_call.1} parent=11 // pred_region
          _
        $region28: #{tpu_custom_call.1} parent=11 // pred_fallthru
          _
        // Predicated region
        $region29: #{tpu_custom_call.1} parent=11 // pred_check
          %p256 = pneg %p175
        $region30: #{tpu_custom_call.1} parent=11 // pred_check_branch
          %258 = sbr.rel (%p256) target = $region32
        $region31: #{tpu_custom_call.1} parent=11 // pred_region
          _
        $region32: #{tpu_custom_call.1} parent=11 // pred_fallthru
          _
        // Predicated region
        $region33: #{tpu_custom_call.1} parent=11 // pred_check
          %p259 = pneg %p196
        $region34: #{tpu_custom_call.1} parent=11 // pred_check_branch
          %261 = sbr.rel (%p259) target = $region36
        $region35: #{tpu_custom_call.1} parent=11 // pred_region
          _
        $region36: #{tpu_custom_call.1} parent=11 // pred_fallthru
          _
      $region12: #{tpu_custom_call.1} parent=5 // pred_fallthru
        _
      %p262 = scmp.lt.s32.totalorder %s18, 2
      // Predicated region
      $region37: #{tpu_custom_call.1} parent=5 // pred_check
        %p263 = pneg %p262
      $region38: #{tpu_custom_call.1} parent=5 // pred_check_branch
        %265 = sbr.rel (%p263) target = $region40
      $region39: #{tpu_custom_call.1} parent=5 // pred_region
        // Predicated region
        $region41: #{tpu_custom_call.1} parent=39 // pred_check
          %p266 = pneg %p59
        $region42: #{tpu_custom_call.1} parent=39 // pred_check_branch
          %268 = sbr.rel (%p266) target = $region44
        $region43: #{tpu_custom_call.1} parent=39 // pred_region
          %s269 = sand.u32 %s49, 1
          %s270 = sand.u32 %s49, 1
          %s271 = smul.addr %s270, 256
          %s272 = scalar_lea.vmem [#allocation5], %s271
          %s273 = smul.u32 8, %s18
          %s274 = smul.addr %s273, 8
          %s275 = scalar_lea.vmem %s1, %s274
          // Predicated region
          $region45: #{tpu_custom_call.1} parent=43 // pred_check
            _
          $region46: #{tpu_custom_call.1} parent=43 // pred_check_branch
            %277 = sbr.rel (0) target = $region48
          $region47: #{tpu_custom_call.1} parent=43 // pred_region
            // Predicated region
            $region49: #{tpu_custom_call.1} parent=47 // pred_check
              _
            $region50: #{tpu_custom_call.1} parent=47 // pred_check_branch
              %279 = sbr.rel (0) target = $region52
            $region51: #{tpu_custom_call.1} parent=47 // pred_region
              // Predicated region
              $region64: #{tpu_custom_call.1} parent=51 // pred_check
                _
              $region65: #{tpu_custom_call.1} parent=51 // pred_check_branch
                %357 = sbr.rel (0) target = $region67
              $region66: #{tpu_custom_call.1} parent=51 // pred_region
                loop: start=0, step=1, limit=1
                $region68: #{tpu_custom_call.1} parent=66 // loop_pre_header
                  _
                $region69: #{tpu_custom_call.1} parent=66 // loop_header
                  %s359 = sphi 0, %s363
                  %p360 = scmp.ge.s32.totalorder %s359, 1
                  %s364 = sphi %s275, %s275
                  %s365 = sphi %s272, %s272
                $region70: #{tpu_custom_call.1} parent=66 // loop_header_branch
                  %362 = sbr.rel (%p360) target = $region74
                $region71: #{tpu_custom_call.1} parent=66 // loop_body
                  %v366 = vld [vmem:[%s364] sm:$0xff]
                  %367 = vst [vmem:[%s365] sm:$0xff] %v366
                  %v368 = vld [vmem:[%s364 + $0x8] sm:$0xff]
                  %369 = vst [vmem:[%s365 + $0x8] sm:$0xff] %v368
                  %v370 = vld [vmem:[%s364 + $0x10] sm:$0xff]
                  %371 = vst [vmem:[%s365 + $0x10] sm:$0xff] %v370
                  %v372 = vld [vmem:[%s364 + $0x18] sm:$0xff]
                  %373 = vst [vmem:[%s365 + $0x18] sm:$0xff] %v372
                  %v374 = vld [vmem:[%s364 + $0x20] sm:$0xff]
                  %375 = vst [vmem:[%s365 + $0x20] sm:$0xff] %v374
                  %v376 = vld [vmem:[%s364 + $0x28] sm:$0xff]
                  %377 = vst [vmem:[%s365 + $0x28] sm:$0xff] %v376
                  %v378 = vld [vmem:[%s364 + $0x30] sm:$0xff]
                  %379 = vst [vmem:[%s365 + $0x30] sm:$0xff] %v378
                  %v380 = vld [vmem:[%s364 + $0x38] sm:$0xff]
                  %381 = vst [vmem:[%s365 + $0x38] sm:$0xff] %v380
                  %v382 = vld [vmem:[%s364 + $0x80] sm:$0xff]
                  %383 = vst [vmem:[%s365 + $0x40] sm:$0xff] %v382
                  %v384 = vld [vmem:[%s364 + $0x88] sm:$0xff]
                  %385 = vst [vmem:[%s365 + $0x48] sm:$0xff] %v384
                  %v386 = vld [vmem:[%s364 + $0x90] sm:$0xff]
                  %387 = vst [vmem:[%s365 + $0x50] sm:$0xff] %v386
                  %v388 = vld [vmem:[%s364 + $0x98] sm:$0xff]
                  %389 = vst [vmem:[%s365 + $0x58] sm:$0xff] %v388
                  %v390 = vld [vmem:[%s364 + $0xa0] sm:$0xff]
                  %391 = vst [vmem:[%s365 + $0x60] sm:$0xff] %v390
                  %v392 = vld [vmem:[%s364 + $0xa8] sm:$0xff]
                  %393 = vst [vmem:[%s365 + $0x68] sm:$0xff] %v392
                  %v394 = vld [vmem:[%s364 + $0xb0] sm:$0xff]
                  %395 = vst [vmem:[%s365 + $0x70] sm:$0xff] %v394
                  %v396 = vld [vmem:[%s364 + $0xb8] sm:$0xff]
                  %397 = vst [vmem:[%s365 + $0x78] sm:$0xff] %v396
                  %v398 = vld [vmem:[%s364 + $0x100] sm:$0xff]
                  %399 = vst [vmem:[%s365 + $0x80] sm:$0xff] %v398
                  %v400 = vld [vmem:[%s364 + $0x108] sm:$0xff]
                  %401 = vst [vmem:[%s365 + $0x88] sm:$0xff] %v400
                  %v402 = vld [vmem:[%s364 + $0x110] sm:$0xff]
                  %403 = vst [vmem:[%s365 + $0x90] sm:$0xff] %v402
                  %v404 = vld [vmem:[%s364 + $0x118] sm:$0xff]
                  %405 = vst [vmem:[%s365 + $0x98] sm:$0xff] %v404
                  %v406 = vld [vmem:[%s364 + $0x120] sm:$0xff]
                  %407 = vst [vmem:[%s365 + $0xa0] sm:$0xff] %v406
                  %v408 = vld [vmem:[%s364 + $0x128] sm:$0xff]
                  %409 = vst [vmem:[%s365 + $0xa8] sm:$0xff] %v408
                  %v410 = vld [vmem:[%s364 + $0x130] sm:$0xff]
                  %411 = vst [vmem:[%s365 + $0xb0] sm:$0xff] %v410
                  %v412 = vld [vmem:[%s364 + $0x138] sm:$0xff]
                  %413 = vst [vmem:[%s365 + $0xb8] sm:$0xff] %v412
                  %v414 = vld [vmem:[%s364 + $0x180] sm:$0xff]
                  %415 = vst [vmem:[%s365 + $0xc0] sm:$0xff] %v414
                  %v416 = vld [vmem:[%s364 + $0x188] sm:$0xff]
                  %417 = vst [vmem:[%s365 + $0xc8] sm:$0xff] %v416
                  %v418 = vld [vmem:[%s364 + $0x190] sm:$0xff]
                  %419 = vst [vmem:[%s365 + $0xd0] sm:$0xff] %v418
                  %v420 = vld [vmem:[%s364 + $0x198] sm:$0xff]
                  %421 = vst [vmem:[%s365 + $0xd8] sm:$0xff] %v420
                  %v422 = vld [vmem:[%s364 + $0x1a0] sm:$0xff]
                  %423 = vst [vmem:[%s365 + $0xe0] sm:$0xff] %v422
                  %v424 = vld [vmem:[%s364 + $0x1a8] sm:$0xff]
                  %425 = vst [vmem:[%s365 + $0xe8] sm:$0xff] %v424
                  %v426 = vld [vmem:[%s364 + $0x1b0] sm:$0xff]
                  %427 = vst [vmem:[%s365 + $0xf0] sm:$0xff] %v426
                  %v428 = vld [vmem:[%s364 + $0x1b8] sm:$0xff]
                  %429 = vst [vmem:[%s365 + $0xf8] sm:$0xff] %v428
                $region72: #{tpu_custom_call.1} parent=66 // loop_footer
                  %s363 = sadd.s32 1, %s359
                $region73: #{tpu_custom_call.1} parent=66 // loop_footer_branch
                  %358 = sbr.rel target = $region69
                $region74: #{tpu_custom_call.1} parent=66 // loop_exit
                  _
              $region67: #{tpu_custom_call.1} parent=51 // pred_fallthru
                _
              // Predicated region
              $region75: #{tpu_custom_call.1} parent=51 // pred_check
                _
              $region76: #{tpu_custom_call.1} parent=51 // pred_check_branch
                %431 = sbr.rel target = $region78
              $region77: #{tpu_custom_call.1} parent=51 // pred_region
                _
              $region78: #{tpu_custom_call.1} parent=51 // pred_fallthru
                _
            $region52: #{tpu_custom_call.1} parent=47 // pred_fallthru
              _
            // Predicated region
            $region53: #{tpu_custom_call.1} parent=47 // pred_check
              _
            $region54: #{tpu_custom_call.1} parent=47 // pred_check_branch
              %281 = sbr.rel target = $region56
            $region55: #{tpu_custom_call.1} parent=47 // pred_region
              %s283 = ssub.s32 256, 1
              loop: start=0, step=1, limit=1
              $region57: #{tpu_custom_call.1} parent=55 // loop_pre_header
                _
              $region58: #{tpu_custom_call.1} parent=55 // loop_header
                %s285 = sphi 0, %s289
                %p286 = scmp.ge.s32.totalorder %s285, 1
                %s290 = sphi %s275, %s275
                %s291 = sphi %s272, %s272
              $region59: #{tpu_custom_call.1} parent=55 // loop_header_branch
                %288 = sbr.rel (%p286) target = $region63
              $region60: #{tpu_custom_call.1} parent=55 // loop_body
                %v292 = vld [vmem:[%s290] sm:%s283]
                %293 = vst [vmem:[%s291] sm:%s283] %v292
                %v294 = vld [vmem:[%s290 + $0x8] sm:%s283]
                %295 = vst [vmem:[%s291 + $0x8] sm:%s283] %v294
                %v296 = vld [vmem:[%s290 + $0x10] sm:%s283]
                %297 = vst [vmem:[%s291 + $0x10] sm:%s283] %v296
                %v298 = vld [vmem:[%s290 + $0x18] sm:%s283]
                %299 = vst [vmem:[%s291 + $0x18] sm:%s283] %v298
                %v300 = vld [vmem:[%s290 + $0x20] sm:%s283]
                %301 = vst [vmem:[%s291 + $0x20] sm:%s283] %v300
                %v302 = vld [vmem:[%s290 + $0x28] sm:%s283]
                %303 = vst [vmem:[%s291 + $0x28] sm:%s283] %v302
                %v304 = vld [vmem:[%s290 + $0x30] sm:%s283]
                %305 = vst [vmem:[%s291 + $0x30] sm:%s283] %v304
                %v306 = vld [vmem:[%s290 + $0x38] sm:%s283]
                %307 = vst [vmem:[%s291 + $0x38] sm:%s283] %v306
                %v308 = vld [vmem:[%s290 + $0x80] sm:%s283]
                %309 = vst [vmem:[%s291 + $0x40] sm:%s283] %v308
                %v310 = vld [vmem:[%s290 + $0x88] sm:%s283]
                %311 = vst [vmem:[%s291 + $0x48] sm:%s283] %v310
                %v312 = vld [vmem:[%s290 + $0x90] sm:%s283]
                %313 = vst [vmem:[%s291 + $0x50] sm:%s283] %v312
                %v314 = vld [vmem:[%s290 + $0x98] sm:%s283]
                %315 = vst [vmem:[%s291 + $0x58] sm:%s283] %v314
                %v316 = vld [vmem:[%s290 + $0xa0] sm:%s283]
                %317 = vst [vmem:[%s291 + $0x60] sm:%s283] %v316
                %v318 = vld [vmem:[%s290 + $0xa8] sm:%s283]
                %319 = vst [vmem:[%s291 + $0x68] sm:%s283] %v318
                %v320 = vld [vmem:[%s290 + $0xb0] sm:%s283]
                %321 = vst [vmem:[%s291 + $0x70] sm:%s283] %v320
                %v322 = vld [vmem:[%s290 + $0xb8] sm:%s283]
                %323 = vst [vmem:[%s291 + $0x78] sm:%s283] %v322
                %v324 = vld [vmem:[%s290 + $0x100] sm:%s283]
                %325 = vst [vmem:[%s291 + $0x80] sm:%s283] %v324
                %v326 = vld [vmem:[%s290 + $0x108] sm:%s283]
                %327 = vst [vmem:[%s291 + $0x88] sm:%s283] %v326
                %v328 = vld [vmem:[%s290 + $0x110] sm:%s283]
                %329 = vst [vmem:[%s291 + $0x90] sm:%s283] %v328
                %v330 = vld [vmem:[%s290 + $0x118] sm:%s283]
                %331 = vst [vmem:[%s291 + $0x98] sm:%s283] %v330
                %v332 = vld [vmem:[%s290 + $0x120] sm:%s283]
                %333 = vst [vmem:[%s291 + $0xa0] sm:%s283] %v332
                %v334 = vld [vmem:[%s290 + $0x128] sm:%s283]
                %335 = vst [vmem:[%s291 + $0xa8] sm:%s283] %v334
                %v336 = vld [vmem:[%s290 + $0x130] sm:%s283]
                %337 = vst [vmem:[%s291 + $0xb0] sm:%s283] %v336
                %v338 = vld [vmem:[%s290 + $0x138] sm:%s283]
                %339 = vst [vmem:[%s291 + $0xb8] sm:%s283] %v338
                %v340 = vld [vmem:[%s290 + $0x180] sm:%s283]
                %341 = vst [vmem:[%s291 + $0xc0] sm:%s283] %v340
                %v342 = vld [vmem:[%s290 + $0x188] sm:%s283]
                %343 = vst [vmem:[%s291 + $0xc8] sm:%s283] %v342
                %v344 = vld [vmem:[%s290 + $0x190] sm:%s283]
                %345 = vst [vmem:[%s291 + $0xd0] sm:%s283] %v344
                %v346 = vld [vmem:[%s290 + $0x198] sm:%s283]
                %347 = vst [vmem:[%s291 + $0xd8] sm:%s283] %v346
                %v348 = vld [vmem:[%s290 + $0x1a0] sm:%s283]
                %349 = vst [vmem:[%s291 + $0xe0] sm:%s283] %v348
                %v350 = vld [vmem:[%s290 + $0x1a8] sm:%s283]
                %351 = vst [vmem:[%s291 + $0xe8] sm:%s283] %v350
                %v352 = vld [vmem:[%s290 + $0x1b0] sm:%s283]
                %353 = vst [vmem:[%s291 + $0xf0] sm:%s283] %v352
                %v354 = vld [vmem:[%s290 + $0x1b8] sm:%s283]
                %355 = vst [vmem:[%s291 + $0xf8] sm:%s283] %v354
              $region61: #{tpu_custom_call.1} parent=55 // loop_footer
                %s289 = sadd.s32 1, %s285
              $region62: #{tpu_custom_call.1} parent=55 // loop_footer_branch
                %284 = sbr.rel target = $region58
              $region63: #{tpu_custom_call.1} parent=55 // loop_exit
                _
            $region56: #{tpu_custom_call.1} parent=47 // pred_fallthru
              _
          $region48: #{tpu_custom_call.1} parent=43 // pred_fallthru
            _
          %432 = vnop
        $region44: #{tpu_custom_call.1} parent=39 // pred_fallthru
          _
        // Predicated region
        $region79: #{tpu_custom_call.1} parent=39 // pred_check
          %p433 = pneg %p85
        $region80: #{tpu_custom_call.1} parent=39 // pred_check_branch
          %435 = sbr.rel (%p433) target = $region82
        $region81: #{tpu_custom_call.1} parent=39 // pred_region
          %p436 = scmp.lt.s32.totalorder %s18, 1
          %s437 = scalar_select %p436, %s18, 1
          %s438 = smul.addr %s437, 8
          %s439 = scalar_lea.vmem %s2, %s438
        $region82: #{tpu_custom_call.1} parent=39 // pred_fallthru
          _
      $region40: #{tpu_custom_call.1} parent=5 // pred_fallthru
        _
      %p440 = scmp.le.s32.totalorder 1, %s18
      %p441 = scmp.lt.s32.totalorder %s18, 3
      %p442 = pnand %p440, %p441
      %p443 = pneg %p442
      // Predicated region
      $region83: #{tpu_custom_call.1} parent=5 // pred_check
        _
      $region84: #{tpu_custom_call.1} parent=5 // pred_check_branch
        %445 = sbr.rel (%p442) target = $region86
      $region85: #{tpu_custom_call.1} parent=5 // pred_region
        %s446 = ssub.s32 %s18, 1
        // Predicated region
        $region87: #{tpu_custom_call.1} parent=85 // pred_check
          %p447 = pneg %p39
        $region88: #{tpu_custom_call.1} parent=85 // pred_check_branch
          %449 = sbr.rel (%p447) target = $region90
        $region89: #{tpu_custom_call.1} parent=85 // pred_region
          %451 = dma.done [#allocation4], 16
        $region90: #{tpu_custom_call.1} parent=85 // pred_fallthru
          _
        %s452 = sand.u32 %s52, 1
        %s453 = sand.u32 %s52, 1
        %s454 = smul.addr %s453, 256
        %s455 = scalar_lea.vmem [#allocation5], %s454
        // Predicated region
        $region91: #{tpu_custom_call.1} parent=85 // pred_check
          %p456 = pneg %p65
        $region92: #{tpu_custom_call.1} parent=85 // pred_check_branch
          %458 = sbr.rel (%p456) target = $region94
        $region93: #{tpu_custom_call.1} parent=85 // pred_region
          _
        $region94: #{tpu_custom_call.1} parent=85 // pred_fallthru
          _
        %459 = sfence
        %p460 = pneg %p39
        %p461 = pneg %p36
        %s462 = sand.u32 %s52, 1
        %s463 = sand.u32 %s52, 1
        %s464 = smul.addr %s463, 256
        %s465 = scalar_lea.vmem [#allocation5], %s464
        %p466 = pneg %p65
        %p467 = pneg %p62
        %p468 = scmp.lt.s32.totalorder %s23, 1
        %s469 = scalar_select %p468, %s23, 1
        %s470 = smul.addr %s469, 8
        %s471 = scalar_lea.vmem %s2, %s470
        %p472 = pneg %p91
        %p473 = pneg %p88
        %p474 = pneg %p112
        %p475 = pneg %p109
        %p476 = pneg %p133
        %p477 = pneg %p130
        %p478 = pneg %p154
        %p479 = pneg %p151
        %p480 = pneg %p175
        %p481 = pneg %p172
        %p482 = pneg %p196
        %p483 = pneg %p193
        %p484 = pneg %p222
        %p485 = pneg %p219
        %s486 = sand.u32 %s209, 1
        %s487 = scalar_lea.sflag [#allocation3], %s486
        %s488 = sand.u32 %s209, 1
        %s489 = smul.addr %s488, 8
        %s490 = scalar_lea.vmem [#allocation6], %s489
        %s491 = smul.u32 8, %s23
        %p492 = scmp.lt.s32.totalorder %s23, 1
        %s493 = scalar_select %p492, %s23, 1
        %s494 = smul.addr %s493, 8
        %s495 = scalar_lea.vmem %s2, %s494
        %s496 = sld [smem:[#allocation2]]
        %v497 = vld [vmem:[%s455] sm:$0xff]
        %v498 = vld [vmem:[%s455 + $0x8] sm:$0xff]
        %v499 = vld [vmem:[%s455 + $0x10] sm:$0xff]
        %v500 = vld [vmem:[%s455 + $0x18] sm:$0xff]
        %v501 = vld [vmem:[%s455 + $0x20] sm:$0xff]
        %v502 = vld [vmem:[%s455 + $0x28] sm:$0xff]
        %v503 = vld [vmem:[%s455 + $0x30] sm:$0xff]
        %v504 = vld [vmem:[%s455 + $0x38] sm:$0xff]
        %v505 = vstv %s496
        %v506 = vmul.f32 %v505, %v497
        %v507 = vmul.f32 %v505, %v498
        %v508 = vmul.f32 %v505, %v499
        %v509 = vmul.f32 %v505, %v500
        %v510 = vmul.f32 %v505, %v501
        %v511 = vmul.f32 %v505, %v502
        %v512 = vmul.f32 %v505, %v503
        %v513 = vmul.f32 %v505, %v504
        %s514 = sld [smem:[#allocation2 + $0x1]]
        %s515 = scalar_lea.vmem %s455, 64 [#allocation5]
        %v516 = vld [vmem:[%s515] sm:$0xff]
        %v517 = vld [vmem:[%s515 + $0x8] sm:$0xff]
        %v518 = vld [vmem:[%s515 + $0x10] sm:$0xff]
        %v519 = vld [vmem:[%s515 + $0x18] sm:$0xff]
        %v520 = vld [vmem:[%s515 + $0x20] sm:$0xff]
        %v521 = vld [vmem:[%s515 + $0x28] sm:$0xff]
        %v522 = vld [vmem:[%s515 + $0x30] sm:$0xff]
        %v523 = vld [vmem:[%s515 + $0x38] sm:$0xff]
        %v524 = vstv %s514
        %v525 = vmul.f32 %v524, %v516
        %v526 = vmul.f32 %v524, %v517
        %v527 = vmul.f32 %v524, %v518
        %v528 = vmul.f32 %v524, %v519
        %v529 = vmul.f32 %v524, %v520
        %v530 = vmul.f32 %v524, %v521
        %v531 = vmul.f32 %v524, %v522
        %v532 = vmul.f32 %v524, %v523
        %v533 = vadd.f32 %v506, %v525
        %v534 = vadd.f32 %v507, %v526
        %v535 = vadd.f32 %v508, %v527
        %v536 = vadd.f32 %v509, %v528
        %v537 = vadd.f32 %v510, %v529
        %v538 = vadd.f32 %v511, %v530
        %v539 = vadd.f32 %v512, %v531
        %v540 = vadd.f32 %v513, %v532
        %s541 = sld [smem:[#allocation2 + $0x2]]
        %s542 = scalar_lea.vmem %s455, 128 [#allocation5]
        %v543 = vld [vmem:[%s542] sm:$0xff]
        %v544 = vld [vmem:[%s542 + $0x8] sm:$0xff]
        %v545 = vld [vmem:[%s542 + $0x10] sm:$0xff]
        %v546 = vld [vmem:[%s542 + $0x18] sm:$0xff]
        %v547 = vld [vmem:[%s542 + $0x20] sm:$0xff]
        %v548 = vld [vmem:[%s542 + $0x28] sm:$0xff]
        %v549 = vld [vmem:[%s542 + $0x30] sm:$0xff]
        %v550 = vld [vmem:[%s542 + $0x38] sm:$0xff]
        %v551 = vstv %s541
        %v552 = vmul.f32 %v551, %v543
        %v553 = vmul.f32 %v551, %v544
        %v554 = vmul.f32 %v551, %v545
        %v555 = vmul.f32 %v551, %v546
        %v556 = vmul.f32 %v551, %v547
        %v557 = vmul.f32 %v551, %v548
        %v558 = vmul.f32 %v551, %v549
        %v559 = vmul.f32 %v551, %v550
        %v560 = vadd.f32 %v533, %v552
        %v561 = vadd.f32 %v534, %v553
        %v562 = vadd.f32 %v535, %v554
        %v563 = vadd.f32 %v536, %v555
        %v564 = vadd.f32 %v537, %v556
        %v565 = vadd.f32 %v538, %v557
        %v566 = vadd.f32 %v539, %v558
        %v567 = vadd.f32 %v540, %v559
        %s568 = sld [smem:[#allocation2 + $0x3]]
        %s569 = scalar_lea.vmem %s455, 192 [#allocation5]
        %v570 = vld [vmem:[%s569] sm:$0xff]
        %v571 = vld [vmem:[%s569 + $0x8] sm:$0xff]
        %v572 = vld [vmem:[%s569 + $0x10] sm:$0xff]
        %v573 = vld [vmem:[%s569 + $0x18] sm:$0xff]
        %v574 = vld [vmem:[%s569 + $0x20] sm:$0xff]
        %v575 = vld [vmem:[%s569 + $0x28] sm:$0xff]
        %v576 = vld [vmem:[%s569 + $0x30] sm:$0xff]
        %v577 = vld [vmem:[%s569 + $0x38] sm:$0xff]
        %v578 = vstv %s568
        %v579 = vmul.f32 %v578, %v570
        %v580 = vmul.f32 %v578, %v571
        %v581 = vmul.f32 %v578, %v572
        %v582 = vmul.f32 %v578, %v573
        %v583 = vmul.f32 %v578, %v574
        %v584 = vmul.f32 %v578, %v575
        %v585 = vmul.f32 %v578, %v576
        %v586 = vmul.f32 %v578, %v577
        %v587 = vadd.f32 %v560, %v579
        %v588 = vadd.f32 %v561, %v580
        %v589 = vadd.f32 %v562, %v581
        %v590 = vadd.f32 %v563, %v582
        %v591 = vadd.f32 %v564, %v583
        %v592 = vadd.f32 %v565, %v584
        %v593 = vadd.f32 %v566, %v585
        %v594 = vadd.f32 %v567, %v586
        %v595 = vld [vmem:[%s3] sm:$0xff]
        %v596 = vld [vmem:[%s3 + $0x8] sm:$0xff]
        %v597 = vld [vmem:[%s3 + $0x10] sm:$0xff]
        %v598 = vld [vmem:[%s3 + $0x18] sm:$0xff]
        %v599 = vld [vmem:[%s4] sm:$0x1]
        %v601 = vperm.slane %v599, 0
        %vm603 = vcmask 261120
        %v605 = vsel %vm603, %v587, 0
        %v608 = vsel %vm603, %v588, 0
        %v611 = vsel %vm603, %v589, 0
        %v614 = vsel %vm603, %v590, 0
        %v617 = vsel %vm603, %v591, 0
        %v620 = vsel %vm603, %v592, 0
        %v623 = vsel %vm603, %v593, 0
        %v626 = vsel %vm603, %v594, 0
        %628 = vmatpush.msra.mxu0 0.0
        %629 = vmatpush.msra.mxu0 0.0
        %630 = vmatpush.msra.mxu0 0.0
        %631 = vmatpush.msra.mxu0 0.0
        %632 = vmatpush.msra.mxu0 0.0
        %633 = vmatpush.msra.mxu0 0.0
        %634 = vmatpush.msra.mxu0 0.0
        %635 = vmatpush.msra.mxu0 0.0
        %636 = vmatpush.msra.mxu0 0.0
        %637 = vmatpush.msra.mxu0 0.0
        %638 = vmatpush.msra.mxu0 0.0
        %639 = vmatpush.msra.mxu0 0.0
        %640 = vmatpush.msra.mxu0 %v598
        %641 = vmatpush.msra.mxu0 %v597
        %642 = vmatpush.msra.mxu0 %v596
        %643 = vmatpush.msra.mxu0 %v595
        %644 = vmatmul.f32.gmra.mxu0 %v605
        %v645 = vpop.f32.mrf.mxu0
        %v646 = vadd.f32 %v601, %v645
        %647 = vmatmul.f32.gmra.mxu0 %v608
        %v648 = vpop.f32.mrf.mxu0
        %v649 = vadd.f32 %v601, %v648
        %650 = vmatmul.f32.gmra.mxu0 %v611
        %v651 = vpop.f32.mrf.mxu0
        %v652 = vadd.f32 %v601, %v651
        %653 = vmatmul.f32.gmra.mxu0 %v614
        %v654 = vpop.f32.mrf.mxu0
        %v655 = vadd.f32 %v601, %v654
        %656 = vmatmul.f32.gmra.mxu0 %v617
        %v657 = vpop.f32.mrf.mxu0
        %v658 = vadd.f32 %v601, %v657
        %659 = vmatmul.f32.gmra.mxu0 %v620
        %v660 = vpop.f32.mrf.mxu0
        %v661 = vadd.f32 %v601, %v660
        %662 = vmatmul.f32.gmra.mxu0 %v623
        %v663 = vpop.f32.mrf.mxu0
        %v664 = vadd.f32 %v601, %v663
        %665 = vmatmul.f32.gmra.mxu0 %v626
        %v666 = vpop.f32.mrf.mxu0
        %v667 = vadd.f32 %v601, %v666
        %668 = vdwg.mxu0
        %v669 = vtanh.pop %v646
        %v670 = vtanh.pop %v649
        %v671 = vtanh.pop %v652
        %v672 = vtanh.pop %v655
        %v673 = vtanh.pop %v658
        %v674 = vtanh.pop %v661
        %v675 = vtanh.pop %v664
        %v676 = vtanh.pop %v667
        %v677 = vld [vmem:[%s5] sm:$0x1]
        %v679 = vperm.slane %v677, 0
        %vm680 = vcmask 130048
        %v681 = vsel %vm680, %v679, 0
        %v684 = vsel %vm680, %v669, 0
        %v687 = vsel %vm680, %v670, 0
        %v690 = vsel %vm680, %v671, 0
        %v693 = vsel %vm680, %v672, 0
        %v696 = vsel %vm680, %v673, 0
        %v699 = vsel %vm680, %v674, 0
        %v702 = vsel %vm680, %v675, 0
        %v705 = vsel %vm680, %v676, 0
        %707 = vmatpush.xpose.msra.mxu0 0.0
        %708 = vmatpush.xpose.msra.mxu0 0.0
        %709 = vmatpush.xpose.msra.mxu0 0.0
        %710 = vmatpush.xpose.msra.mxu0 0.0
        %711 = vmatpush.xpose.msra.mxu0 0.0
        %712 = vmatpush.xpose.msra.mxu0 0.0
        %713 = vmatpush.xpose.msra.mxu0 0.0
        %714 = vmatpush.xpose.msra.mxu0 0.0
        %715 = vmatpush.xpose.msra.mxu0 %v705
        %716 = vmatpush.xpose.msra.mxu0 %v702
        %717 = vmatpush.xpose.msra.mxu0 %v699
        %718 = vmatpush.xpose.msra.mxu0 %v696
        %719 = vmatpush.xpose.msra.mxu0 %v693
        %720 = vmatpush.xpose.msra.mxu0 %v690
        %721 = vmatpush.xpose.msra.mxu0 %v687
        %722 = vmatpush.xpose.msra.mxu0 %v684
        %723 = vmatmul.f32.gmra.mxu0 %v681
        %v724 = vpop.f32.mrf.mxu0
        %v725 = vadd.f32 0.0, %v724
        %726 = vdwg.mxu0
        %v727 = vld [vmem:[%s495] sm:$0xff]
        %vm728 = vcmp.gt.f32.partialorder %v727, 0.0
        %v729 = vsel %vm728, %v725, -1e+30
        %vm730 = vcmask 523264
        %v731 = vsel %vm730, %v729, -inf
        %732 = vmax.xlane.f32.xlu0 %v731
        %v733 = vpop.xlane.xlu0 %732
        %v734 = vsub.f32 %v729, %v733
        %v735 = vmul.f32 %v734, 1.442695
        %v736 = vpow.pop %v735
        %v737 = vmul.f32 %v736, %v727
        %v738 = vsel %vm730, %v737, 0.0
        %739 = vadd.xlane.f32.xlu0 %v738
        %v740 = vpop.xlane.xlu0 %739
        %v741 = vmax.f32 %v740, 1e-30
        %v742 = vrcp.pop %v741
        %v743 = vmul.f32 %v737, %v742
        %v745 = vsel %vm730, %v743, 0
        %747 = vmatpush.msra.mxu0 0.0
        %748 = vmatpush.msra.mxu0 0.0
        %749 = vmatpush.msra.mxu0 0.0
        %750 = vmatpush.msra.mxu0 0.0
        %751 = vmatpush.msra.mxu0 0.0
        %752 = vmatpush.msra.mxu0 0.0
        %753 = vmatpush.msra.mxu0 0.0
        %754 = vmatpush.msra.mxu0 0.0
        %755 = vmatpush.msra.mxu0 %v594
        %756 = vmatpush.msra.mxu0 %v593
        %757 = vmatpush.msra.mxu0 %v592
        %758 = vmatpush.msra.mxu0 %v591
        %759 = vmatpush.msra.mxu0 %v590
        %760 = vmatpush.msra.mxu0 %v589
        %761 = vmatpush.msra.mxu0 %v588
        %762 = vmatpush.msra.mxu0 %v587
        %763 = vmatmul.f32.gmra.mxu0 %v745
        %v764 = vpop.f32.mrf.mxu0
        %v765 = vadd.f32 0.0, %v764
        %766 = vdwg.mxu0
        %v767 = vld [vmem:[%s6] sm:$0xff]
        %v768 = vld [vmem:[%s6 + $0x8] sm:$0xff]
        %v769 = vld [vmem:[%s6 + $0x10] sm:$0xff]
        %v770 = vld [vmem:[%s6 + $0x18] sm:$0xff]
        %v771 = vld [vmem:[%s7] sm:$0x1]
        %v773 = vperm.slane %v771, 0
        %v776 = vsel %vm603, %v765, 0
        %778 = vmatpush.msra.mxu0 0.0
        %779 = vmatpush.msra.mxu0 0.0
        %780 = vmatpush.msra.mxu0 0.0
        %781 = vmatpush.msra.mxu0 0.0
        %782 = vmatpush.msra.mxu0 0.0
        %783 = vmatpush.msra.mxu0 0.0
        %784 = vmatpush.msra.mxu0 0.0
        %785 = vmatpush.msra.mxu0 0.0
        %786 = vmatpush.msra.mxu0 0.0
        %787 = vmatpush.msra.mxu0 0.0
        %788 = vmatpush.msra.mxu0 0.0
        %789 = vmatpush.msra.mxu0 0.0
        %790 = vmatpush.msra.mxu0 %v770
        %791 = vmatpush.msra.mxu0 %v769
        %792 = vmatpush.msra.mxu0 %v768
        %793 = vmatpush.msra.mxu0 %v767
        %794 = vmatmul.f32.gmra.mxu0 %v776
        %v795 = vpop.f32.mrf.mxu0
        %v796 = vadd.f32 %v773, %v795
        %797 = vdwg.mxu0
        %798 = vrot.lane.b32.xlu0 %v765, 4
        %v799 = vpop.permute.xlu0 %798
        %vm801 = vcmask 31744
        %v802 = vsel %vm801, %v796, %v799
        %vm803 = vcmask 293888
        %v804 = vsel %vm803, %v802, 0.0
        %805 = vst [vmem:[%s490] sm:$0xff] %v804
        %s806 = sand.u32 %s209, 1
        %s807 = scalar_lea.sflag [#allocation3], %s806
        %s808 = sand.u32 %s209, 1
        %s809 = smul.addr %s808, 8
        %s810 = scalar_lea.vmem [#allocation6], %s809
        // Predicated region
        $region95: #{tpu_custom_call.1} parent=85 // pred_check
          %p811 = pneg %p219
        $region96: #{tpu_custom_call.1} parent=85 // pred_check_branch
          %813 = sbr.rel (%p811) target = $region98
        $region97: #{tpu_custom_call.1} parent=85 // pred_region
          %815 = vsyncadd %s807, 0
          %s816 = smul.addr %s23, 8
          %s817 = scalar_lea.hbm %s8, %s816
          %s819 = sshll.u32 %s810, 4
          %s820 = int_to_ptr.vmem [resolvable:$true] %s819
          %s821 = sshll.u32 %s817, 4
          %s822 = int_to_ptr.hbm [resolvable:$true] %s821
          %824 = dma.vmem_to_hbm [thread:$0]  %s820, 128, %s822, %s807
        $region98: #{tpu_custom_call.1} parent=85 // pred_fallthru
          _
      $region86: #{tpu_custom_call.1} parent=5 // pred_fallthru
        _
      %p825 = scmp.le.s32.totalorder 2, %s18
      // Predicated region
      $region99: #{tpu_custom_call.1} parent=5 // pred_check
        %p826 = pneg %p825
      $region100: #{tpu_custom_call.1} parent=5 // pred_check_branch
        %828 = sbr.rel (%p826) target = $region102
      $region101: #{tpu_custom_call.1} parent=5 // pred_region
        %s829 = ssub.s32 %s18, 2
        // Predicated region
        $region103: #{tpu_custom_call.1} parent=101 // pred_check
          %p830 = pneg %p225
        $region104: #{tpu_custom_call.1} parent=101 // pred_check_branch
          %832 = sbr.rel (%p830) target = $region106
        $region105: #{tpu_custom_call.1} parent=101 // pred_region
          %s833 = sand.u32 %s210, 1
          %s834 = scalar_lea.sflag [#allocation3], %s833
          %s835 = sand.u32 %s210, 1
          %s836 = smul.addr %s835, 8
          %s837 = scalar_lea.vmem [#allocation6], %s836
          %839 = dma.done %s834, 128
        $region106: #{tpu_custom_call.1} parent=101 // pred_fallthru
          _
      $region102: #{tpu_custom_call.1} parent=5 // pred_fallthru
        _
    $region6: #{tpu_custom_call.1} parent=1 // loop_footer
      %s22 = sadd.s32 1, %s18
    $region7: #{tpu_custom_call.1} parent=1 // loop_footer_branch
      %17 = sbr.rel target = $region3
    $region8: #{tpu_custom_call.1} parent=1 // loop_exit
      _
    %840 = vsyncpa [#allocation3], 1
    %s841 = scalar_lea.sflag [#allocation3], 1
    %842 = vsyncpa %s841, 1
    %843 = vsyncpa [#allocation4], 1
    %s844 = scalar_lea.sflag [#allocation4], 1
    %845 = vsyncpa %s844, 1

</llo_original>
